<compile_context>
chip_gen: v5e
topology: v5e:2x2
jax: 0.10.0
libtpu: 0.0.40
codegen_flags: <defaults>
</compile_context>

<pallas_src>
import functools
import math

import jax
import jax.numpy as jnp
from jax import lax
from jax.experimental import pallas as pl
from jax.experimental.pallas import tpu as pltpu


def _round_up(x, m):
    return ((x + m - 1) // m) * m


def _pick_tile(t, target=256):
    """Largest tile <= target that divides t and is a multiple of 8 (else t)."""
    if t <= target:
        return t
    for cand in range(target, 7, -1):
        if t % cand == 0 and cand % 8 == 0:
            return cand
    return t


# ----------------------------------------------------------------------------
# Kernel A: fused QKV projection (output already lane-chunked by head)
# ----------------------------------------------------------------------------
def _qkv_proj_kernel(x_ref, w_ref, b_ref, o_ref, *, compute_dtype):
    x = x_ref[0].astype(compute_dtype)                      # (tt, Cp)
    y = jnp.dot(x, w_ref[...], preferred_element_type=jnp.float32) + b_ref[...]
    o_ref[0] = y.astype(o_ref.dtype)                        # (tt, 3*Ep)


# ----------------------------------------------------------------------------
# Kernel B: flash attention (scalar-bias sink) + out-proj + residual + LN
#   grid = (B, n_q_tiles, H, n_kv_tiles)
# ----------------------------------------------------------------------------
def _attn_out_ln_kernel(q_ref, k_ref, v_ref, x_ref, wo_ref, bo_ref, gamma_ref,
                        beta_ref, o_ref, m_sc, l_sc, acc_sc, out_sc,
                        *, c_real, eps, compute_dtype):
    iq = pl.program_id(1)
    h = pl.program_id(2)
    ikv = pl.program_id(3)
    n_h = pl.num_programs(2)
    n_kv = pl.num_programs(3)
    tq = q_ref.shape[1]
    tkv = k_ref.shape[1]
    q0 = iq * tq
    k0 = ikv * tkv

    @pl.when(ikv == 0)
    def _():
        # scalar-bias "sink": an always-present key with logit 0 and value 0.
        m_sc[...] = jnp.zeros_like(m_sc)
        l_sc[...] = jnp.ones_like(l_sc)
        acc_sc[...] = jnp.zeros_like(acc_sc)

    @pl.when(jnp.logical_and(ikv == 0, h == 0))
    def _():
        out_sc[...] = jnp.zeros_like(out_sc)

    # Strictly causal: key j visible to query i  iff  j < i.
    # Skip KV tiles that are entirely in the masked future (~half the work).
    @pl.when(k0 < q0 + tq - 1)
    def _():
        q = q_ref[0]                                        # (tq, Dhp)
        k = k_ref[0]                                        # (tkv, Dhp)
        v = v_ref[0]                                        # (tkv, Dhp)
        # q @ k^T without materializing a transpose (MXU handles trans_b)
        s = lax.dot_general(q, k, (((1,), (1,)), ((), ())),
                            preferred_element_type=jnp.float32)  # (tq, tkv)
        qi = q0 + lax.broadcasted_iota(jnp.int32, (tq, tkv), 0)
        kj = k0 + lax.broadcasted_iota(jnp.int32, (tq, tkv), 1)
        # additive finite mask (bf16-safe, no inf-inf NaN risk)
        s = s + jnp.where(kj < qi, 0.0, -1e30)
        m_prev = m_sc[...]
        m_new = jnp.maximum(m_prev, jnp.max(s, axis=-1, keepdims=True))
        alpha = jnp.exp(m_prev - m_new)
        p = jnp.exp(s - m_new)
        l_sc[...] = alpha * l_sc[...] + jnp.sum(p, axis=-1, keepdims=True)
        acc_sc[...] = alpha * acc_sc[...] + jnp.dot(
            p.astype(compute_dtype), v, preferred_element_type=jnp.float32)
        m_sc[...] = m_new

    @pl.when(ikv == n_kv - 1)
    def _():
        # finalize this head, fuse its slice of the output projection
        inv_l = pl.reciprocal(l_sc[...], approx=False)      # (tq, 1)
        attn_h = (acc_sc[...] * inv_l).astype(compute_dtype)  # (tq, Dhp)
        out_sc[...] += jnp.dot(attn_h, wo_ref[...],
                               preferred_element_type=jnp.float32)

    @pl.when(jnp.logical_and(ikv == n_kv - 1, h == n_h - 1))
    def _():
        y = out_sc[...] + bo_ref[...] + x_ref[0]            # residual, f32
        inv_c = 1.0 / c_real
        mean = jnp.sum(y, axis=-1, keepdims=True) * inv_c   # pad channels are 0
        cmask = lax.broadcasted_iota(jnp.int32, (1, y.shape[-1]), 1) < c_real
        d = jnp.where(cmask, y - mean, 0.0)                 # mask out padding
        var = jnp.sum(d * d, axis=-1, keepdims=True) * inv_c
        o_ref[0] = (d * lax.rsqrt(var + eps) * gamma_ref[...]
                    + beta_ref[...]).astype(o_ref.dtype)


# ----------------------------------------------------------------------------
# Wrapper
# ----------------------------------------------------------------------------
def self_attention_forward(X, params, *, num_heads, eps=1e-5,
                           compute_dtype=jnp.float32):
    """X: (T, B, C) float32 -> (T, B, C) float32."""
    T, B, C = X.shape
    E = params["wq"].shape[0]
    assert E % num_heads == 0
    H = num_heads
    Dh = E // H
    Dhp = _round_up(Dh, 128)          # lane-dense head dim
    Cp = _round_up(C, 128)            # lane-dense channel dim
    Ep = H * Dhp
    f32 = jnp.float32
    scaling = Dh ** -0.5

    # --- pack & pad parameters (all transposes/fusions done once, outside) ---
    def pad_in(w, b):                 # (E, C) -> (H, Dhp, Cp), (E,) -> (H, Dhp)
        w = jnp.pad(w.reshape(H, Dh, C), ((0, 0), (0, Dhp - Dh), (0, Cp - C)))
        b = jnp.pad(b.reshape(H, Dh), ((0, 0), (0, Dhp - Dh)))
        return w, b

    # fold the 1/sqrt(Dh) query scaling into Wq / bq (zero in-kernel cost)
    wq_h, bq_h = pad_in(params["wq"] * scaling, params["bq"] * scaling)
    wk_h, bk_h = pad_in(params["wk"], params["bk"])
    wv_h, bv_h = pad_in(params["wv"], params["bv"])

    w_all = jnp.concatenate([wq_h, wk_h, wv_h], axis=0)          # (3H, Dhp, Cp)
    b_all = jnp.concatenate([bq_h, bk_h, bv_h], axis=0)          # (3H, Dhp)
    wqkv = jnp.transpose(w_all.reshape(3 * Ep, Cp)).astype(compute_dtype)
    bqkv = b_all.reshape(1, 3 * Ep).astype(f32)

    wo = params["wo"].reshape(C, H, Dh).transpose(1, 2, 0)       # (H, Dh, C)
    wo = jnp.pad(wo, ((0, 0), (0, Dhp - Dh), (0, Cp - C)))
    wo_t = wo.reshape(Ep, Cp).astype(compute_dtype)              # (Ep, Cp)
    bo_p = jnp.pad(params["bo"], (0, Cp - C)).reshape(1, Cp).astype(f32)
    gamma_p = jnp.pad(params["gamma"], (0, Cp - C)).reshape(1, Cp).astype(f32)
    beta_p = jnp.pad(params["beta"], (0, Cp - C)).reshape(1, Cp).astype(f32)

    x_p = jnp.pad(jnp.transpose(X, (1, 0, 2)),
                  ((0, 0), (0, 0), (0, Cp - C)))                 # (B, T, Cp)

    tq = _pick_tile(T)
    tkv = tq
    n_t = T // tq
    n_kv = T // tkv

    # --- Kernel A: fused QKV projection, lane-chunked per-head output --------
    qkv = pl.pallas_call(
        functools.partial(_qkv_proj_kernel, compute_dtype=compute_dtype),
        out_shape=jax.ShapeDtypeStruct((B, T, 3 * Ep), compute_dtype),
        grid=(B, n_t),
        in_specs=[
            pl.BlockSpec((1, tq, Cp), lambda b, it: (b, it, 0)),
            # constant index_map -> fetched once, not per grid step
            pl.BlockSpec((Cp, 3 * Ep), lambda b, it: (0, 0)),
            pl.BlockSpec((1, 3 * Ep), lambda b, it: (0, 0)),
        ],
        out_specs=pl.BlockSpec((1, tq, 3 * Ep), lambda b, it: (b, it, 0)),
        compiler_params=pltpu.CompilerParams(
            dimension_semantics=("parallel", "parallel")),
    )(x_p, wqkv, bqkv)

    # --- Kernel B: flash attention + out-proj + residual + LayerNorm ---------
    out_p = pl.pallas_call(
        functools.partial(_attn_out_ln_kernel, c_real=C, eps=eps,
                          compute_dtype=compute_dtype),
        out_shape=jax.ShapeDtypeStruct((B, T, Cp), X.dtype),
        grid=(B, n_t, H, n_kv),
        in_specs=[
            # head splitting is pure BlockSpec indexing on the lane-chunked QKV
            pl.BlockSpec((1, tq, Dhp), lambda b, iq, h, ikv: (b, iq, h)),        # q
            pl.BlockSpec((1, tkv, Dhp), lambda b, iq, h, ikv: (b, ikv, H + h)),  # k
            pl.BlockSpec((1, tkv, Dhp), lambda b, iq, h, ikv: (b, ikv, 2 * H + h)),  # v
            pl.BlockSpec((1, tq, Cp), lambda b, iq, h, ikv: (b, iq, 0)),         # x
            pl.BlockSpec((Dhp, Cp), lambda b, iq, h, ikv: (h, 0)),               # wo_h
            pl.BlockSpec((1, Cp), lambda b, iq, h, ikv: (0, 0)),                 # bo
            pl.BlockSpec((1, Cp), lambda b, iq, h, ikv: (0, 0)),                 # gamma
            pl.BlockSpec((1, Cp), lambda b, iq, h, ikv: (0, 0)),                 # beta
        ],
        out_specs=pl.BlockSpec((1, tq, Cp), lambda b, iq, h, ikv: (b, iq, 0)),
        scratch_shapes=[
            pltpu.VMEM((tq, 1), jnp.float32),     # running max
            pltpu.VMEM((tq, 1), jnp.float32),     # running denom (sink = 1)
            pltpu.VMEM((tq, Dhp), jnp.float32),   # per-head attention accum
            pltpu.VMEM((tq, Cp), jnp.float32),    # out-projection accum
        ],
        compiler_params=pltpu.CompilerParams(
            dimension_semantics=("parallel", "parallel", "arbitrary",
                                 "arbitrary")),
    )(qkv, qkv, qkv, x_p, wo_t, bo_p, gamma_p, beta_p)

    return jnp.transpose(out_p[:, :, :C], (1, 0, 2))             # back to (T,B,C)


# ----------------------------------------------------------------------------
# Pure-JAX reference (mirrors the PyTorch forward), for verification
# ----------------------------------------------------------------------------
def reference_forward(X, params, *, num_heads, eps=1e-5):
    T, B, C = X.shape
    E = params["wq"].shape[0]
    Dh = E // num_heads

    q = jnp.einsum("tbc,ec->tbe", X, params["wq"]) + params["bq"]
    k = jnp.einsum("tbc,ec->tbe", X, params["wk"]) + params["bk"]
    v = jnp.einsum("tbc,ec->tbe", X, params["wv"]) + params["bv"]
    q = q * (Dh ** -0.5)

    qh = q.reshape(T, B * num_heads, Dh).transpose(1, 0, 2)
    kh = k.reshape(T, B * num_heads, Dh).transpose(1, 0, 2)
    vh = v.reshape(T, B * num_heads, Dh).transpose(1, 0, 2)

    s = jnp.einsum("ntd,nsd->nts", qh, kh)
    i = jnp.arange(T)[:, None]
    j = jnp.arange(T)[None, :]
    s = jnp.where(j < i, s, -jnp.inf)               # strictly causal
    s = jnp.concatenate([jnp.zeros((B * num_heads, T, 1), s.dtype), s], axis=2)
    vb = jnp.concatenate([jnp.zeros((B * num_heads, 1, Dh), vh.dtype), vh],
                         axis=1)
    w = jax.nn.softmax(s, axis=-1)
    attn = jnp.einsum("nts,nsd->ntd", w, vb)
    attn = attn.transpose(1, 0, 2).reshape(T, B, E)

    out = jnp.einsum("tbe,ce->tbc", attn, params["wo"]) + params["bo"]
    y = out + X
    mean = y.mean(-1, keepdims=True)
    var = ((y - mean) ** 2).mean(-1, keepdims=True)
    return (y - mean) / jnp.sqrt(var + eps) * params["gamma"] + params["beta"]


if __name__ == "__main__":
    # small shapes: seq T=8, batch B=2, out_channels C=32, embed_dim E=32, heads=4
    T, B, C, E, H = 8, 2, 32, 32, 4

    key = jax.random.PRNGKey(0)
    ks = jax.random.split(key, 11)
    f32 = jnp.float32
    params = {
        "wq": jax.random.normal(ks[0], (E, C), f32) * (1.0 / math.sqrt(C)),
        "bq": jax.random.normal(ks[1], (E,), f32) * 0.02,
        "wk": jax.random.normal(ks[2], (E, C), f32) * (1.0 / math.sqrt(C)),
        "bk": jax.random.normal(ks[3], (E,), f32) * 0.02,
        "wv": jax.random.normal(ks[4], (E, C), f32) * (1.0 / math.sqrt(C)),
        "bv": jax.random.normal(ks[5], (E,), f32) * 0.02,
        "wo": jax.random.normal(ks[6], (C, E), f32) * (1.0 / math.sqrt(E)),
        "bo": jax.random.normal(ks[7], (C,), f32) * 0.02,
        "gamma": 1.0 + 0.1 * jax.random.normal(ks[8], (C,), f32),
        "beta": 0.1 * jax.random.normal(ks[9], (C,), f32),
    }
    X = jax.random.normal(ks[10], (T, B, C), f32)

    ref = reference_forward(X, params, num_heads=H)

    out = jax.block_until_ready(self_attention_forward(X, params, num_heads=H))
    assert out.shape == (T, B, C)
    max_err = float(jnp.max(jnp.abs(out - ref)))
    assert jnp.allclose(out, ref, atol=1e-4, rtol=1e-4), f"max_err={max_err}"

    print("KERNEL_OK")
</pallas_src>

<mosaic_0001>
module attributes {stable_mosaic.version = 11 : i64} {
  func.func @_qkv_proj_kernel(%arg0: i32, %arg1: i32, %arg2: memref<1x8x128xf32, #tpu.memory_space<vmem>>, %arg3: memref<128x1536xf32, #tpu.memory_space<vmem>>, %arg4: memref<1x1536xf32, #tpu.memory_space<vmem>>, %arg5: memref<1x8x1536xf32, #tpu.memory_space<vmem>>) attributes {dimension_semantics = [#tpu.dimension_semantics<parallel>, #tpu.dimension_semantics<parallel>], iteration_bounds = array<i64: 2, 1>, scalar_prefetch = 0 : i64, scratch_operands = 0 : i64, tpu.core_type = #tpu.core_type<tc>, window_params = [{transform_indices = @transform_0, window_bounds = array<i64: 1, 8, 128>}, {pipeline_mode = #tpu.pipeline_mode<synchronous>, transform_indices = @transform_1, window_bounds = array<i64: 128, 1536>}, {pipeline_mode = #tpu.pipeline_mode<synchronous>, transform_indices = @transform_2, window_bounds = array<i64: 1, 1536>}, {transform_indices = @transform_3, window_bounds = array<i64: 1, 8, 1536>}]} {
    %c0 = arith.constant 0 : index
    %c0_0 = arith.constant 0 : index
    %c0_1 = arith.constant 0 : index
    %0 = vector.load %arg2[%c0, %c0_0, %c0_1] : memref<1x8x128xf32, #tpu.memory_space<vmem>>, vector<1x8x128xf32>
    %1 = vector.shape_cast %0 : vector<1x8x128xf32> to vector<8x128xf32>
    %c0_2 = arith.constant 0 : index
    %c0_3 = arith.constant 0 : index
    %2 = vector.load %arg3[%c0_2, %c0_3] : memref<128x1536xf32, #tpu.memory_space<vmem>>, vector<128x1536xf32>
    %cst = arith.constant dense<0.000000e+00> : vector<8x1536xf32>
    %3 = tpu.matmul %1, %2, %cst {dimension_numbers = #tpu.dot_dimension_numbers<[1], [0], [0], [1], [0, 0, 1, 1], [], []>} : vector<8x128xf32>, vector<128x1536xf32>, vector<8x1536xf32> -> vector<8x1536xf32>
    %c0_4 = arith.constant 0 : index
    %c0_5 = arith.constant 0 : index
    %4 = vector.load %arg4[%c0_4, %c0_5] : memref<1x1536xf32, #tpu.memory_space<vmem>>, vector<1x1536xf32>
    %5 = vector.broadcast %4 : vector<1x1536xf32> to vector<8x1536xf32>
    %6 = arith.addf %3, %5 : vector<8x1536xf32>
    %c0_6 = arith.constant 0 : index
    %c0_7 = arith.constant 0 : index
    %c0_8 = arith.constant 0 : index
    %7 = vector.load %arg5[%c0_6, %c0_7, %c0_8] : memref<1x8x1536xf32, #tpu.memory_space<vmem>>, vector<1x8x1536xf32>
    %8 = vector.shape_cast %7 : vector<1x8x1536xf32> to vector<8x1536xf32>
    %9 = vector.shape_cast %6 : vector<8x1536xf32> to vector<1x8x1536xf32>
    tpu.vector_store %arg5[%c0_6, %c0_7, %c0_8], %9 {strides = array<i32>} : memref<1x8x1536xf32, #tpu.memory_space<vmem>>, vector<1x8x1536xf32>,
    return
  }
  func.func @transform_0(%arg0: i32, %arg1: i32) -> (i32, i32, i32) {
    %c0_i32 = arith.constant 0 : i32
    %c0_i32_0 = arith.constant 0 : i32
    return %arg0, %arg1, %c0_i32 : i32, i32, i32
  }
  func.func @transform_1(%arg0: i32, %arg1: i32) -> (i32, i32) {
    %c0_i32 = arith.constant 0 : i32
    %c0_i32_0 = arith.constant 0 : i32
    %c0_i32_1 = arith.constant 0 : i32
    return %c0_i32, %c0_i32_0 : i32, i32
  }
  func.func @transform_2(%arg0: i32, %arg1: i32) -> (i32, i32) {
    %c0_i32 = arith.constant 0 : i32
    %c0_i32_0 = arith.constant 0 : i32
    %c0_i32_1 = arith.constant 0 : i32
    return %c0_i32, %c0_i32_0 : i32, i32
  }
  func.func @transform_3(%arg0: i32, %arg1: i32) -> (i32, i32, i32) {
    %c0_i32 = arith.constant 0 : i32
    %c0_i32_0 = arith.constant 0 : i32
    return %arg0, %arg1, %c0_i32 : i32, i32, i32
  }
}

</mosaic_0001>

<llo_original>
// kernel: tpu_custom_call.1
$region0: #{tpu_custom_call.1}
  #allocation0 [shape = 'u32[]', space=smem, size = 0x4, offset = 0x4, fixed_abs, tag = 'smem constant byte address 0x4 - core index']
  #allocation1 [shape = 'u32[72,128]{1,0:T(1,128)}', space=vmem, size = 0x9000, scoped, tag = 'internal scratch']
  %s0 = inlined_call_operand.hbm [shape: f32[2,8,128], index: 0, kind: input, shape index: {}]
  %s1 = inlined_call_operand.hbm [shape: f32[128,1536], index: 1, kind: input, shape index: {}]
  %s2 = inlined_call_operand.hbm [shape: f32[1,1536], index: 2, kind: input, shape index: {}]
  %s3 = inlined_call_operand.hbm [shape: f32[2,8,1536], index: 3, kind: output, shape index: {}]
  %s4 = sld [smem:[#allocation0]]
  $region57: #{tpu_custom_call.1} parent=0
    _
  %s6 = ssub.s32 1, %s4
  %s7 = scalar_select 0, %s6, %s4
  $region1: #{tpu_custom_call.1} parent=0
    #allocation2 [shape = 'u8[8192]{0}', space=vmem, size = 0x2000, scoped, tag = 'input window, operand 0']
    #allocation3 [shape = 's32[2]{0}', space=sflag, size = 0x8, scoped, tag = 'scoped memory for tpu_custom_call.1']
    #allocation4 [shape = 's32[2]{0}', space=sflag, size = 0x8, scoped, tag = 'scoped memory for tpu_custom_call.1']
    #allocation5 [shape = 'u8[786432]{0}', space=vmem, size = 0xc0000, scoped, tag = 'input window, operand 1, single buffered']
    #allocation6 [shape = 's32[1]{0}', space=sflag, size = 0x4, scoped, tag = 'scoped memory for tpu_custom_call.1']
    #allocation7 [shape = 'u8[6144]{0}', space=vmem, size = 0x1800, scoped, tag = 'input window, operand 2, single buffered']
    #allocation8 [shape = 'u8[98304]{0}', space=vmem, size = 0x18000, scoped, tag = 'output window, operand 0']
    %8 = vsyncpa [#allocation3], 0
    %s9 = scalar_lea.sflag [#allocation3], 1
    %10 = vsyncpa %s9, 0
    %11 = vsyncpa [#allocation6], 0
    %12 = vsyncpa [#allocation4], 0
    %s13 = scalar_lea.sflag [#allocation4], 1
    %14 = vsyncpa %s13, 0
    loop: start=0, step=1, limit=4
    $region2: #{tpu_custom_call.1} parent=1 // loop_pre_header
      _
    $region3: #{tpu_custom_call.1} parent=1 // loop_header
      %s16 = sphi 0, %s20
      %p17 = scmp.ge.s32.totalorder %s16, 4
      %s23 = sphi 0, %s35
      %s24 = sphi 0, %s31
      %s25 = sphi 0, %s23
      %s26 = sphi 0, %s24
      %s27 = sphi 0, %s25
      %s28 = sphi 0, %s26
      %s40 = sphi 0, %s42
      %s43 = sphi 0, %s40
      %s44 = sphi 0, %s43
      %s60 = sphi 0, %s44
      %s64 = sphi 0, %s64
      %s66 = sphi 0, %s64
      %s67 = sphi 0, %s66
      %s81 = sphi 0, %s67
      %s85 = sphi 0, %s85
      %s87 = sphi 0, %s85
      %s88 = sphi 0, %s87
      %s102 = sphi 0, %s88
      %s110 = sphi 0, %s112
      %s113 = sphi 0, %s110
      %s114 = sphi 0, %s113
      %s130 = sphi 0, %s114
    $region4: #{tpu_custom_call.1} parent=1 // loop_header_branch
      %19 = sbr.rel (%p17) target = $region8
    $region5: #{tpu_custom_call.1} parent=1 // loop_body
      %s21 = ssub.s32 %s16, 1
      %s22 = ssub.s32 %s16, 2
      %s29 = sadd.s32 1, %s24
      %p30 = scmp.ge.s32.totalorder %s29, 1
      %s31 = scalar_select %p30, 0, %s29
      %s32 = sadd.s32 1, %s23
      %s33 = scalar_select %p30, %s32, %s23
      %p34 = scmp.ge.s32.totalorder %s33, 2
      %s35 = scalar_select %p34, 0, %s33
      %s36 = ssub.s32 %s23, %s35
      %s37 = ssub.s32 %s24, %s31
      %s38 = sor.u32 %s36, %s37
      %p39 = scmp.eq.s32.totalorder %s38, 0
      %s41 = sadd.s32 %s40, 1
      %s42 = scalar_select %p39, %s40, %s41
      %p45 = pneg %p39
      %p46 = scmp.eq.s32.totalorder %s16, 1
      %p47 = por %p45, %p46
      %p48 = scmp.ne.s32.totalorder %s40, %s43
      %p49 = scmp.eq.s32.totalorder %s16, 0
      %p50 = por %p48, %p49
      %p51 = scmp.ne.s32.totalorder %s40, %s43
      %p52 = scmp.eq.s32.totalorder %s21, 1
      %p53 = por %p51, %p52
      %p54 = scmp.ne.s32.totalorder %s43, %s44
      %p55 = scmp.eq.s32.totalorder %s21, 0
      %p56 = por %p54, %p55
      %p57 = scmp.ne.s32.totalorder %s43, %s44
      %p58 = scmp.eq.s32.totalorder %s22, 1
      %p59 = por %p57, %p58
      %p61 = scmp.ne.s32.totalorder %s44, %s60
      %p62 = scmp.eq.s32.totalorder %s22, 0
      %p63 = por %p61, %p62
      %s65 = sadd.s32 %s64, 1
      %p68 = scmp.eq.s32.totalorder %s16, 1
      %p69 = scmp.ne.s32.totalorder %s64, %s66
      %p70 = scmp.eq.s32.totalorder %s16, 0
      %p71 = por %p69, %p70
      %p72 = scmp.ne.s32.totalorder %s64, %s66
      %p73 = scmp.eq.s32.totalorder %s21, 1
      %p74 = por %p72, %p73
      %p75 = scmp.ne.s32.totalorder %s66, %s67
      %p76 = scmp.eq.s32.totalorder %s21, 0
      %p77 = por %p75, %p76
      %p78 = scmp.ne.s32.totalorder %s66, %s67
      %p79 = scmp.eq.s32.totalorder %s22, 1
      %p80 = por %p78, %p79
      %p82 = scmp.ne.s32.totalorder %s67, %s81
      %p83 = scmp.eq.s32.totalorder %s22, 0
      %p84 = por %p82, %p83
      %s86 = sadd.s32 %s85, 1
      %p89 = scmp.eq.s32.totalorder %s16, 1
      %p90 = scmp.ne.s32.totalorder %s85, %s87
      %p91 = scmp.eq.s32.totalorder %s16, 0
      %p92 = por %p90, %p91
      %p93 = scmp.ne.s32.totalorder %s85, %s87
      %p94 = scmp.eq.s32.totalorder %s21, 1
      %p95 = por %p93, %p94
      %p96 = scmp.ne.s32.totalorder %s87, %s88
      %p97 = scmp.eq.s32.totalorder %s21, 0
      %p98 = por %p96, %p97
      %p99 = scmp.ne.s32.totalorder %s87, %s88
      %p100 = scmp.eq.s32.totalorder %s22, 1
      %p101 = por %p99, %p100
      %p103 = scmp.ne.s32.totalorder %s88, %s102
      %p104 = scmp.eq.s32.totalorder %s22, 0
      %p105 = por %p103, %p104
      %s106 = ssub.s32 %s23, %s35
      %s107 = ssub.s32 %s24, %s31
      %s108 = sor.u32 %s106, %s107
      %p109 = scmp.eq.s32.totalorder %s108, 0
      %s111 = sadd.s32 %s110, 1
      %s112 = scalar_select %p109, %s110, %s111
      %p115 = pneg %p109
      %p116 = scmp.eq.s32.totalorder %s16, 1
      %p117 = por %p115, %p116
      %p118 = scmp.ne.s32.totalorder %s110, %s113
      %p119 = scmp.eq.s32.totalorder %s16, 0
      %p120 = por %p118, %p119
      %p121 = scmp.ne.s32.totalorder %s110, %s113
      %p122 = scmp.eq.s32.totalorder %s21, 1
      %p123 = por %p121, %p122
      %p124 = scmp.ne.s32.totalorder %s113, %s114
      %p125 = scmp.eq.s32.totalorder %s21, 0
      %p126 = por %p124, %p125
      %p127 = scmp.ne.s32.totalorder %s113, %s114
      %p128 = scmp.eq.s32.totalorder %s22, 1
      %p129 = por %p127, %p128
      %p131 = scmp.ne.s32.totalorder %s114, %s130
      %p132 = scmp.eq.s32.totalorder %s22, 0
      %p133 = por %p131, %p132
      %p134 = scmp.le.s32.totalorder 1, %s16
      %p135 = scmp.lt.s32.totalorder %s16, 3
      %p136 = pnand %p134, %p135
      %p137 = pneg %p136
      // Predicated region
      $region9: #{tpu_custom_call.1} parent=5 // pred_check
        _
      $region10: #{tpu_custom_call.1} parent=5 // pred_check_branch
        %139 = sbr.rel (%p136) target = $region12
      $region11: #{tpu_custom_call.1} parent=5 // pred_region
        %s140 = ssub.s32 %s16, 1
        // Predicated region
        $region13: #{tpu_custom_call.1} parent=11 // pred_check
          %p141 = pneg %p77
        $region14: #{tpu_custom_call.1} parent=11 // pred_check_branch
          %143 = sbr.rel (%p141) target = $region16
        $region15: #{tpu_custom_call.1} parent=11 // pred_region
          %145 = vsyncadd [#allocation6], 0
          %s146 = sshll.u32 %s1, 4
          %s147 = int_to_ptr.hbm [resolvable:$true] %s146
          %s148 = sshll.u32 [#allocation5], 4
          %s149 = int_to_ptr.vmem [resolvable:$true] %s148
          %154 = dma.hbm_to_vmem [thread:$0]  %s147, 24576, %s149, [#allocation6], 1536, 1536, 96
        $region16: #{tpu_custom_call.1} parent=11 // pred_fallthru
          _
        // Predicated region
        $region17: #{tpu_custom_call.1} parent=11 // pred_check
          %p155 = pneg %p98
        $region18: #{tpu_custom_call.1} parent=11 // pred_check_branch
          %157 = sbr.rel (%p155) target = $region20
        $region19: #{tpu_custom_call.1} parent=11 // pred_region
          %159 = vsyncadd [#allocation6], 0
          %s161 = sshll.u32 %s2, 4
          %s162 = int_to_ptr.hbm [resolvable:$true] %s161
          %s163 = sshll.u32 [#allocation7], 4
          %s164 = int_to_ptr.vmem [resolvable:$true] %s163
          %166 = dma.hbm_to_vmem [thread:$0]  %s162, 192, %s164, [#allocation6]
        $region20: #{tpu_custom_call.1} parent=11 // pred_fallthru
          _
      $region12: #{tpu_custom_call.1} parent=5 // pred_fallthru
        _
      %p167 = scmp.lt.s32.totalorder %s16, 2
      // Predicated region
      $region21: #{tpu_custom_call.1} parent=5 // pred_check
        %p168 = pneg %p167
      $region22: #{tpu_custom_call.1} parent=5 // pred_check_branch
        %170 = sbr.rel (%p168) target = $region24
      $region23: #{tpu_custom_call.1} parent=5 // pred_region
        // Predicated region
        $region25: #{tpu_custom_call.1} parent=23 // pred_check
          %p171 = pneg %p50
        $region26: #{tpu_custom_call.1} parent=23 // pred_check_branch
          %173 = sbr.rel (%p171) target = $region28
        $region27: #{tpu_custom_call.1} parent=23 // pred_region
          %s174 = sand.u32 %s40, 1
          %s175 = scalar_lea.sflag [#allocation3], %s174
          %s176 = sand.u32 %s40, 1
          %s177 = smul.addr %s176, 8
          %s178 = scalar_lea.vmem [#allocation2], %s177
          %180 = vsyncadd %s175, 0
          %s181 = sadd.s32 %s24, %s23
          %s182 = smul.addr %s181, 8
          %s183 = scalar_lea.hbm %s0, %s182
          %s185 = sshll.u32 %s183, 4
          %s186 = int_to_ptr.hbm [resolvable:$true] %s185
          %s187 = sshll.u32 %s178, 4
          %s188 = int_to_ptr.vmem [resolvable:$true] %s187
          %190 = dma.hbm_to_vmem [thread:$0]  %s186, 128, %s188, %s175
        $region28: #{tpu_custom_call.1} parent=23 // pred_fallthru
          _
      $region24: #{tpu_custom_call.1} parent=5 // pred_fallthru
        _
      %p191 = scmp.le.s32.totalorder 1, %s16
      %p192 = scmp.lt.s32.totalorder %s16, 3
      %p193 = pnand %p191, %p192
      %p194 = pneg %p193
      // Predicated region
      $region29: #{tpu_custom_call.1} parent=5 // pred_check
        _
      $region30: #{tpu_custom_call.1} parent=5 // pred_check_branch
        %196 = sbr.rel (%p193) target = $region32
      $region31: #{tpu_custom_call.1} parent=5 // pred_region
        %s197 = ssub.s32 %s16, 1
        %s198 = sand.u32 %s43, 1
        %s199 = scalar_lea.sflag [#allocation3], %s198
        %s200 = sand.u32 %s43, 1
        %s201 = smul.addr %s200, 8
        %s202 = scalar_lea.vmem [#allocation2], %s201
        // Predicated region
        $region33: #{tpu_custom_call.1} parent=31 // pred_check
          %p203 = pneg %p56
        $region34: #{tpu_custom_call.1} parent=31 // pred_check_branch
          %205 = sbr.rel (%p203) target = $region36
        $region35: #{tpu_custom_call.1} parent=31 // pred_region
          %207 = dma.done %s199, 128
        $region36: #{tpu_custom_call.1} parent=31 // pred_fallthru
          _
        // Predicated region
        $region37: #{tpu_custom_call.1} parent=31 // pred_check
          %p208 = pneg %p77
        $region38: #{tpu_custom_call.1} parent=31 // pred_check_branch
          %210 = sbr.rel (%p208) target = $region40
        $region39: #{tpu_custom_call.1} parent=31 // pred_region
          %212 = dma.done [#allocation6], 24576
        $region40: #{tpu_custom_call.1} parent=31 // pred_fallthru
          _
        // Predicated region
        $region41: #{tpu_custom_call.1} parent=31 // pred_check
          %p213 = pneg %p98
        $region42: #{tpu_custom_call.1} parent=31 // pred_check_branch
          %215 = sbr.rel (%p213) target = $region44
        $region43: #{tpu_custom_call.1} parent=31 // pred_region
          %217 = dma.done [#allocation6], 192
        $region44: #{tpu_custom_call.1} parent=31 // pred_fallthru
          _
        %s218 = sand.u32 %s43, 1
        %s219 = scalar_lea.sflag [#allocation3], %s218
        %s220 = sand.u32 %s43, 1
        %s221 = smul.addr %s220, 8
        %s222 = scalar_lea.vmem [#allocation2], %s221
        %p223 = pneg %p56
        %p224 = pneg %p53
        %p225 = pneg %p77
        %p226 = pneg %p74
        %p227 = pneg %p98
        %p228 = pneg %p95
        %p229 = pneg %p126
        %p230 = pneg %p123
        %s231 = sand.u32 %s113, 1
        %s232 = scalar_lea.sflag [#allocation4], %s231
        %s233 = sand.u32 %s113, 1
        %s234 = smul.addr %s233, 96
        %s235 = scalar_lea.vmem [#allocation8], %s234
        %v236 = vld [vmem:[%s202] sm:$0xff]
        %v237 = vld [vmem:[#allocation5] sm:$0xff]
        %v238 = vld [vmem:[#allocation5 + $0x8] sm:$0xff]
        %v239 = vld [vmem:[#allocation5 + $0x10] sm:$0xff]
        %v240 = vld [vmem:[#allocation5 + $0x18] sm:$0xff]
        %v241 = vld [vmem:[#allocation5 + $0x20] sm:$0xff]
        %v242 = vld [vmem:[#allocation5 + $0x28] sm:$0xff]
        %v243 = vld [vmem:[#allocation5 + $0x30] sm:$0xff]
        %v244 = vld [vmem:[#allocation5 + $0x38] sm:$0xff]
        %v245 = vld [vmem:[#allocation5 + $0x40] sm:$0xff]
        %v246 = vld [vmem:[#allocation5 + $0x48] sm:$0xff]
        %v247 = vld [vmem:[#allocation5 + $0x50] sm:$0xff]
        %v248 = vld [vmem:[#allocation5 + $0x58] sm:$0xff]
        %v249 = vld [vmem:[#allocation5 + $0x60] sm:$0xff]
        %v250 = vld [vmem:[#allocation5 + $0x68] sm:$0xff]
        %v251 = vld [vmem:[#allocation5 + $0x70] sm:$0xff]
        %v252 = vld [vmem:[#allocation5 + $0x78] sm:$0xff]
        %v253 = vld [vmem:[#allocation5 + $0x80] sm:$0xff]
        %v254 = vld [vmem:[#allocation5 + $0x88] sm:$0xff]
        %v255 = vld [vmem:[#allocation5 + $0x90] sm:$0xff]
        %v256 = vld [vmem:[#allocation5 + $0x98] sm:$0xff]
        %v257 = vld [vmem:[#allocation5 + $0xa0] sm:$0xff]
        %v258 = vld [vmem:[#allocation5 + $0xa8] sm:$0xff]
        %v259 = vld [vmem:[#allocation5 + $0xb0] sm:$0xff]
        %v260 = vld [vmem:[#allocation5 + $0xb8] sm:$0xff]
        %v261 = vld [vmem:[#allocation5 + $0xc0] sm:$0xff]
        %v262 = vld [vmem:[#allocation5 + $0xc8] sm:$0xff]
        %v263 = vld [vmem:[#allocation5 + $0xd0] sm:$0xff]
        %v264 = vld [vmem:[#allocation5 + $0xd8] sm:$0xff]
        %v265 = vld [vmem:[#allocation5 + $0xe0] sm:$0xff]
        %v266 = vld [vmem:[#allocation5 + $0xe8] sm:$0xff]
        %v267 = vld [vmem:[#allocation5 + $0xf0] sm:$0xff]
        %v268 = vld [vmem:[#allocation5 + $0xf8] sm:$0xff]
        %v269 = vld [vmem:[#allocation5 + $0x100] sm:$0xff]
        %v270 = vld [vmem:[#allocation5 + $0x108] sm:$0xff]
        %v271 = vld [vmem:[#allocation5 + $0x110] sm:$0xff]
        %v272 = vld [vmem:[#allocation5 + $0x118] sm:$0xff]
        %v273 = vld [vmem:[#allocation5 + $0x120] sm:$0xff]
        %v274 = vld [vmem:[#allocation5 + $0x128] sm:$0xff]
        %v275 = vld [vmem:[#allocation5 + $0x130] sm:$0xff]
        %v276 = vld [vmem:[#allocation5 + $0x138] sm:$0xff]
        %v277 = vld [vmem:[#allocation5 + $0x140] sm:$0xff]
        %v278 = vld [vmem:[#allocation5 + $0x148] sm:$0xff]
        %v279 = vld [vmem:[#allocation5 + $0x150] sm:$0xff]
        %v280 = vld [vmem:[#allocation5 + $0x158] sm:$0xff]
        %v281 = vld [vmem:[#allocation5 + $0x160] sm:$0xff]
        %v282 = vld [vmem:[#allocation5 + $0x168] sm:$0xff]
        %v283 = vld [vmem:[#allocation5 + $0x170] sm:$0xff]
        %v284 = vld [vmem:[#allocation5 + $0x178] sm:$0xff]
        %v285 = vld [vmem:[#allocation5 + $0x180] sm:$0xff]
        %v286 = vld [vmem:[#allocation5 + $0x188] sm:$0xff]
        %v287 = vld [vmem:[#allocation5 + $0x190] sm:$0xff]
        %v288 = vld [vmem:[#allocation5 + $0x198] sm:$0xff]
        %v289 = vld [vmem:[#allocation5 + $0x1a0] sm:$0xff]
        %v290 = vld [vmem:[#allocation5 + $0x1a8] sm:$0xff]
        %v291 = vld [vmem:[#allocation5 + $0x1b0] sm:$0xff]
        %v292 = vld [vmem:[#allocation5 + $0x1b8] sm:$0xff]
        %v293 = vld [vmem:[#allocation5 + $0x1c0] sm:$0xff]
        %v294 = vld [vmem:[#allocation5 + $0x1c8] sm:$0xff]
        %v295 = vld [vmem:[#allocation5 + $0x1d0] sm:$0xff]
        %v296 = vld [vmem:[#allocation5 + $0x1d8] sm:$0xff]
        %v297 = vld [vmem:[#allocation5 + $0x1e0] sm:$0xff]
        %v298 = vld [vmem:[#allocation5 + $0x1e8] sm:$0xff]
        %v299 = vld [vmem:[#allocation5 + $0x1f0] sm:$0xff]
        %v300 = vld [vmem:[#allocation5 + $0x1f8] sm:$0xff]
        %v301 = vld [vmem:[#allocation5 + $0x200] sm:$0xff]
        %v302 = vld [vmem:[#allocation5 + $0x208] sm:$0xff]
        %v303 = vld [vmem:[#allocation5 + $0x210] sm:$0xff]
        %v304 = vld [vmem:[#allocation5 + $0x218] sm:$0xff]
        %v305 = vld [vmem:[#allocation5 + $0x220] sm:$0xff]
        %v306 = vld [vmem:[#allocation5 + $0x228] sm:$0xff]
        %v307 = vld [vmem:[#allocation5 + $0x230] sm:$0xff]
        %v308 = vld [vmem:[#allocation5 + $0x238] sm:$0xff]
        %v309 = vld [vmem:[#allocation5 + $0x240] sm:$0xff]
        %v310 = vld [vmem:[#allocation5 + $0x248] sm:$0xff]
        %v311 = vld [vmem:[#allocation5 + $0x250] sm:$0xff]
        %v312 = vld [vmem:[#allocation5 + $0x258] sm:$0xff]
        %v313 = vld [vmem:[#allocation5 + $0x260] sm:$0xff]
        %v314 = vld [vmem:[#allocation5 + $0x268] sm:$0xff]
        %v315 = vld [vmem:[#allocation5 + $0x270] sm:$0xff]
        %v316 = vld [vmem:[#allocation5 + $0x278] sm:$0xff]
        %v317 = vld [vmem:[#allocation5 + $0x280] sm:$0xff]
        %v318 = vld [vmem:[#allocation5 + $0x288] sm:$0xff]
        %v319 = vld [vmem:[#allocation5 + $0x290] sm:$0xff]
        %v320 = vld [vmem:[#allocation5 + $0x298] sm:$0xff]
        %v321 = vld [vmem:[#allocation5 + $0x2a0] sm:$0xff]
        %v322 = vld [vmem:[#allocation5 + $0x2a8] sm:$0xff]
        %v323 = vld [vmem:[#allocation5 + $0x2b0] sm:$0xff]
        %v324 = vld [vmem:[#allocation5 + $0x2b8] sm:$0xff]
        %v325 = vld [vmem:[#allocation5 + $0x2c0] sm:$0xff]
        %v326 = vld [vmem:[#allocation5 + $0x2c8] sm:$0xff]
        %v327 = vld [vmem:[#allocation5 + $0x2d0] sm:$0xff]
        %v328 = vld [vmem:[#allocation5 + $0x2d8] sm:$0xff]
        %v329 = vld [vmem:[#allocation5 + $0x2e0] sm:$0xff]
        %v330 = vld [vmem:[#allocation5 + $0x2e8] sm:$0xff]
        %v331 = vld [vmem:[#allocation5 + $0x2f0] sm:$0xff]
        %v332 = vld [vmem:[#allocation5 + $0x2f8] sm:$0xff]
        %v333 = vld [vmem:[#allocation5 + $0x300] sm:$0xff]
        %v334 = vld [vmem:[#allocation5 + $0x308] sm:$0xff]
        %v335 = vld [vmem:[#allocation5 + $0x310] sm:$0xff]
        %v336 = vld [vmem:[#allocation5 + $0x318] sm:$0xff]
        %v337 = vld [vmem:[#allocation5 + $0x320] sm:$0xff]
        %v338 = vld [vmem:[#allocation5 + $0x328] sm:$0xff]
        %v339 = vld [vmem:[#allocation5 + $0x330] sm:$0xff]
        %v340 = vld [vmem:[#allocation5 + $0x338] sm:$0xff]
        %v341 = vld [vmem:[#allocation5 + $0x340] sm:$0xff]
        %v342 = vld [vmem:[#allocation5 + $0x348] sm:$0xff]
        %v343 = vld [vmem:[#allocation5 + $0x350] sm:$0xff]
        %v344 = vld [vmem:[#allocation5 + $0x358] sm:$0xff]
        %v345 = vld [vmem:[#allocation5 + $0x360] sm:$0xff]
        %v346 = vld [vmem:[#allocation5 + $0x368] sm:$0xff]
        %v347 = vld [vmem:[#allocation5 + $0x370] sm:$0xff]
        %v348 = vld [vmem:[#allocation5 + $0x378] sm:$0xff]
        %v349 = vld [vmem:[#allocation5 + $0x380] sm:$0xff]
        %v350 = vld [vmem:[#allocation5 + $0x388] sm:$0xff]
        %v351 = vld [vmem:[#allocation5 + $0x390] sm:$0xff]
        %v352 = vld [vmem:[#allocation5 + $0x398] sm:$0xff]
        %v353 = vld [vmem:[#allocation5 + $0x3a0] sm:$0xff]
        %v354 = vld [vmem:[#allocation5 + $0x3a8] sm:$0xff]
        %v355 = vld [vmem:[#allocation5 + $0x3b0] sm:$0xff]
        %v356 = vld [vmem:[#allocation5 + $0x3b8] sm:$0xff]
        %v357 = vld [vmem:[#allocation5 + $0x3c0] sm:$0xff]
        %v358 = vld [vmem:[#allocation5 + $0x3c8] sm:$0xff]
        %v359 = vld [vmem:[#allocation5 + $0x3d0] sm:$0xff]
        %v360 = vld [vmem:[#allocation5 + $0x3d8] sm:$0xff]
        %v361 = vld [vmem:[#allocation5 + $0x3e0] sm:$0xff]
        %v362 = vld [vmem:[#allocation5 + $0x3e8] sm:$0xff]
        %v363 = vld [vmem:[#allocation5 + $0x3f0] sm:$0xff]
        %v364 = vld [vmem:[#allocation5 + $0x3f8] sm:$0xff]
        %v365 = vld [vmem:[#allocation5 + $0x400] sm:$0xff]
        %v366 = vld [vmem:[#allocation5 + $0x408] sm:$0xff]
        %v367 = vld [vmem:[#allocation5 + $0x410] sm:$0xff]
        %v368 = vld [vmem:[#allocation5 + $0x418] sm:$0xff]
        %v369 = vld [vmem:[#allocation5 + $0x420] sm:$0xff]
        %v370 = vld [vmem:[#allocation5 + $0x428] sm:$0xff]
        %v371 = vld [vmem:[#allocation5 + $0x430] sm:$0xff]
        %v372 = vld [vmem:[#allocation5 + $0x438] sm:$0xff]
        %v373 = vld [vmem:[#allocation5 + $0x440] sm:$0xff]
        %v374 = vld [vmem:[#allocation5 + $0x448] sm:$0xff]
        %v375 = vld [vmem:[#allocation5 + $0x450] sm:$0xff]
        %v376 = vld [vmem:[#allocation5 + $0x458] sm:$0xff]
        %v377 = vld [vmem:[#allocation5 + $0x460] sm:$0xff]
        %v378 = vld [vmem:[#allocation5 + $0x468] sm:$0xff]
        %v379 = vld [vmem:[#allocation5 + $0x470] sm:$0xff]
        %v380 = vld [vmem:[#allocation5 + $0x478] sm:$0xff]
        %v381 = vld [vmem:[#allocation5 + $0x480] sm:$0xff]
        %v382 = vld [vmem:[#allocation5 + $0x488] sm:$0xff]
        %v383 = vld [vmem:[#allocation5 + $0x490] sm:$0xff]
        %v384 = vld [vmem:[#allocation5 + $0x498] sm:$0xff]
        %v385 = vld [vmem:[#allocation5 + $0x4a0] sm:$0xff]
        %v386 = vld [vmem:[#allocation5 + $0x4a8] sm:$0xff]
        %v387 = vld [vmem:[#allocation5 + $0x4b0] sm:$0xff]
        %v388 = vld [vmem:[#allocation5 + $0x4b8] sm:$0xff]
        %v389 = vld [vmem:[#allocation5 + $0x4c0] sm:$0xff]
        %v390 = vld [vmem:[#allocation5 + $0x4c8] sm:$0xff]
        %v391 = vld [vmem:[#allocation5 + $0x4d0] sm:$0xff]
        %v392 = vld [vmem:[#allocation5 + $0x4d8] sm:$0xff]
        %v393 = vld [vmem:[#allocation5 + $0x4e0] sm:$0xff]
        %v394 = vld [vmem:[#allocation5 + $0x4e8] sm:$0xff]
        %v395 = vld [vmem:[#allocation5 + $0x4f0] sm:$0xff]
        %v396 = vld [vmem:[#allocation5 + $0x4f8] sm:$0xff]
        %v397 = vld [vmem:[#allocation5 + $0x500] sm:$0xff]
        %v398 = vld [vmem:[#allocation5 + $0x508] sm:$0xff]
        %v399 = vld [vmem:[#allocation5 + $0x510] sm:$0xff]
        %v400 = vld [vmem:[#allocation5 + $0x518] sm:$0xff]
        %v401 = vld [vmem:[#allocation5 + $0x520] sm:$0xff]
        %v402 = vld [vmem:[#allocation5 + $0x528] sm:$0xff]
        %v403 = vld [vmem:[#allocation5 + $0x530] sm:$0xff]
        %v404 = vld [vmem:[#allocation5 + $0x538] sm:$0xff]
        %v405 = vld [vmem:[#allocation5 + $0x540] sm:$0xff]
        %v406 = vld [vmem:[#allocation5 + $0x548] sm:$0xff]
        %v407 = vld [vmem:[#allocation5 + $0x550] sm:$0xff]
        %v408 = vld [vmem:[#allocation5 + $0x558] sm:$0xff]
        %v409 = vld [vmem:[#allocation5 + $0x560] sm:$0xff]
        %v410 = vld [vmem:[#allocation5 + $0x568] sm:$0xff]
        %v411 = vld [vmem:[#allocation5 + $0x570] sm:$0xff]
        %v412 = vld [vmem:[#allocation5 + $0x578] sm:$0xff]
        %v413 = vld [vmem:[#allocation5 + $0x580] sm:$0xff]
        %v414 = vld [vmem:[#allocation5 + $0x588] sm:$0xff]
        %v415 = vld [vmem:[#allocation5 + $0x590] sm:$0xff]
        %v416 = vld [vmem:[#allocation5 + $0x598] sm:$0xff]
        %v417 = vld [vmem:[#allocation5 + $0x5a0] sm:$0xff]
        %v418 = vld [vmem:[#allocation5 + $0x5a8] sm:$0xff]
        %v419 = vld [vmem:[#allocation5 + $0x5b0] sm:$0xff]
        %v420 = vld [vmem:[#allocation5 + $0x5b8] sm:$0xff]
        %v421 = vld [vmem:[#allocation5 + $0x5c0] sm:$0xff]
        %v422 = vld [vmem:[#allocation5 + $0x5c8] sm:$0xff]
        %v423 = vld [vmem:[#allocation5 + $0x5d0] sm:$0xff]
        %v424 = vld [vmem:[#allocation5 + $0x5d8] sm:$0xff]
        %v425 = vld [vmem:[#allocation5 + $0x5e0] sm:$0xff]
        %v426 = vld [vmem:[#allocation5 + $0x5e8] sm:$0xff]
        %v427 = vld [vmem:[#allocation5 + $0x5f0] sm:$0xff]
        %v428 = vld [vmem:[#allocation5 + $0x5f8] sm:$0xff]
        %v429 = vld [vmem:[#allocation7] sm:$0xff]
        %v430 = vld [vmem:[#allocation7 + $0x8] sm:$0xf]
        %v433 = vperm.slane %v429, 0
        %v434 = vperm.slane %v429, 1
        %v435 = vperm.slane %v429, 2
        %v436 = vperm.slane %v429, 3
        %v437 = vperm.slane %v429, 4
        %v438 = vperm.slane %v429, 5
        %v439 = vperm.slane %v429, 6
        %v440 = vperm.slane %v429, 7
        %v441 = vperm.slane %v430, 0
        %v442 = vperm.slane %v430, 1
        %v443 = vperm.slane %v430, 2
        %v444 = vperm.slane %v430, 3
        %457 = vmatpush.msra.mxu0 %v417
        %458 = vmatpush.msra.mxu0 %v405
        %459 = vmatpush.msra.mxu0 %v393
        %460 = vmatpush.msra.mxu0 %v381
        %461 = vmatpush.msra.mxu0 %v369
        %462 = vmatpush.msra.mxu0 %v357
        %463 = vmatpush.msra.mxu0 %v345
        %464 = vmatpush.msra.mxu0 %v333
        %465 = vmatpush.msra.mxu0 %v321
        %466 = vmatpush.msra.mxu0 %v309
        %467 = vmatpush.msra.mxu0 %v297
        %468 = vmatpush.msra.mxu0 %v285
        %469 = vmatpush.msra.mxu0 %v273
        %470 = vmatpush.msra.mxu0 %v261
        %471 = vmatpush.msra.mxu0 %v249
        %472 = vmatpush.msra.mxu0 %v237
        %473 = vmatmul.f32.gmra.mxu0 %v236
        %v474 = vpop.f32.mrf.mxu0
        %v475 = vadd.f32 %v433, %v474
        %476 = vdwg.mxu0
        %477 = vmatpush.msra.mxu0 %v418
        %478 = vmatpush.msra.mxu0 %v406
        %479 = vmatpush.msra.mxu0 %v394
        %480 = vmatpush.msra.mxu0 %v382
        %481 = vmatpush.msra.mxu0 %v370
        %482 = vmatpush.msra.mxu0 %v358
        %483 = vmatpush.msra.mxu0 %v346
        %484 = vmatpush.msra.mxu0 %v334
        %485 = vmatpush.msra.mxu0 %v322
        %486 = vmatpush.msra.mxu0 %v310
        %487 = vmatpush.msra.mxu0 %v298
        %488 = vmatpush.msra.mxu0 %v286
        %489 = vmatpush.msra.mxu0 %v274
        %490 = vmatpush.msra.mxu0 %v262
        %491 = vmatpush.msra.mxu0 %v250
        %492 = vmatpush.msra.mxu0 %v238
        %493 = vmatmul.f32.gmra.mxu0 %v236
        %v494 = vpop.f32.mrf.mxu0
        %v495 = vadd.f32 %v434, %v494
        %496 = vdwg.mxu0
        %497 = vmatpush.msra.mxu0 %v419
        %498 = vmatpush.msra.mxu0 %v407
        %499 = vmatpush.msra.mxu0 %v395
        %500 = vmatpush.msra.mxu0 %v383
        %501 = vmatpush.msra.mxu0 %v371
        %502 = vmatpush.msra.mxu0 %v359
        %503 = vmatpush.msra.mxu0 %v347
        %504 = vmatpush.msra.mxu0 %v335
        %505 = vmatpush.msra.mxu0 %v323
        %506 = vmatpush.msra.mxu0 %v311
        %507 = vmatpush.msra.mxu0 %v299
        %508 = vmatpush.msra.mxu0 %v287
        %509 = vmatpush.msra.mxu0 %v275
        %510 = vmatpush.msra.mxu0 %v263
        %511 = vmatpush.msra.mxu0 %v251
        %512 = vmatpush.msra.mxu0 %v239
        %513 = vmatmul.f32.gmra.mxu0 %v236
        %v514 = vpop.f32.mrf.mxu0
        %v515 = vadd.f32 %v435, %v514
        %516 = vdwg.mxu0
        %517 = vmatpush.msra.mxu0 %v420
        %518 = vmatpush.msra.mxu0 %v408
        %519 = vmatpush.msra.mxu0 %v396
        %520 = vmatpush.msra.mxu0 %v384
        %521 = vmatpush.msra.mxu0 %v372
        %522 = vmatpush.msra.mxu0 %v360
        %523 = vmatpush.msra.mxu0 %v348
        %524 = vmatpush.msra.mxu0 %v336
        %525 = vmatpush.msra.mxu0 %v324
        %526 = vmatpush.msra.mxu0 %v312
        %527 = vmatpush.msra.mxu0 %v300
        %528 = vmatpush.msra.mxu0 %v288
        %529 = vmatpush.msra.mxu0 %v276
        %530 = vmatpush.msra.mxu0 %v264
        %531 = vmatpush.msra.mxu0 %v252
        %532 = vmatpush.msra.mxu0 %v240
        %533 = vmatmul.f32.gmra.mxu0 %v236
        %v534 = vpop.f32.mrf.mxu0
        %v535 = vadd.f32 %v436, %v534
        %536 = vdwg.mxu0
        %537 = vmatpush.msra.mxu0 %v421
        %538 = vmatpush.msra.mxu0 %v409
        %539 = vmatpush.msra.mxu0 %v397
        %540 = vmatpush.msra.mxu0 %v385
        %541 = vmatpush.msra.mxu0 %v373
        %542 = vmatpush.msra.mxu0 %v361
        %543 = vmatpush.msra.mxu0 %v349
        %544 = vmatpush.msra.mxu0 %v337
        %545 = vmatpush.msra.mxu0 %v325
        %546 = vmatpush.msra.mxu0 %v313
        %547 = vmatpush.msra.mxu0 %v301
        %548 = vmatpush.msra.mxu0 %v289
        %549 = vmatpush.msra.mxu0 %v277
        %550 = vmatpush.msra.mxu0 %v265
        %551 = vmatpush.msra.mxu0 %v253
        %552 = vmatpush.msra.mxu0 %v241
        %553 = vmatmul.f32.gmra.mxu0 %v236
        %v554 = vpop.f32.mrf.mxu0
        %v555 = vadd.f32 %v437, %v554
        %556 = vdwg.mxu0
        %557 = vmatpush.msra.mxu0 %v422
        %558 = vmatpush.msra.mxu0 %v410
        %559 = vmatpush.msra.mxu0 %v398
        %560 = vmatpush.msra.mxu0 %v386
        %561 = vmatpush.msra.mxu0 %v374
        %562 = vmatpush.msra.mxu0 %v362
        %563 = vmatpush.msra.mxu0 %v350
        %564 = vmatpush.msra.mxu0 %v338
        %565 = vmatpush.msra.mxu0 %v326
        %566 = vmatpush.msra.mxu0 %v314
        %567 = vmatpush.msra.mxu0 %v302
        %568 = vmatpush.msra.mxu0 %v290
        %569 = vmatpush.msra.mxu0 %v278
        %570 = vmatpush.msra.mxu0 %v266
        %571 = vmatpush.msra.mxu0 %v254
        %572 = vmatpush.msra.mxu0 %v242
        %573 = vmatmul.f32.gmra.mxu0 %v236
        %v574 = vpop.f32.mrf.mxu0
        %v575 = vadd.f32 %v438, %v574
        %576 = vdwg.mxu0
        %577 = vmatpush.msra.mxu0 %v423
        %578 = vmatpush.msra.mxu0 %v411
        %579 = vmatpush.msra.mxu0 %v399
        %580 = vmatpush.msra.mxu0 %v387
        %581 = vmatpush.msra.mxu0 %v375
        %582 = vmatpush.msra.mxu0 %v363
        %583 = vmatpush.msra.mxu0 %v351
        %584 = vmatpush.msra.mxu0 %v339
        %585 = vmatpush.msra.mxu0 %v327
        %586 = vmatpush.msra.mxu0 %v315
        %587 = vmatpush.msra.mxu0 %v303
        %588 = vmatpush.msra.mxu0 %v291
        %589 = vmatpush.msra.mxu0 %v279
        %590 = vmatpush.msra.mxu0 %v267
        %591 = vmatpush.msra.mxu0 %v255
        %592 = vmatpush.msra.mxu0 %v243
        %593 = vmatmul.f32.gmra.mxu0 %v236
        %v594 = vpop.f32.mrf.mxu0
        %v595 = vadd.f32 %v439, %v594
        %596 = vdwg.mxu0
        %597 = vmatpush.msra.mxu0 %v424
        %598 = vmatpush.msra.mxu0 %v412
        %599 = vmatpush.msra.mxu0 %v400
        %600 = vmatpush.msra.mxu0 %v388
        %601 = vmatpush.msra.mxu0 %v376
        %602 = vmatpush.msra.mxu0 %v364
        %603 = vmatpush.msra.mxu0 %v352
        %604 = vmatpush.msra.mxu0 %v340
        %605 = vmatpush.msra.mxu0 %v328
        %606 = vmatpush.msra.mxu0 %v316
        %607 = vmatpush.msra.mxu0 %v304
        %608 = vmatpush.msra.mxu0 %v292
        %609 = vmatpush.msra.mxu0 %v280
        %610 = vmatpush.msra.mxu0 %v268
        %611 = vmatpush.msra.mxu0 %v256
        %612 = vmatpush.msra.mxu0 %v244
        %613 = vmatmul.f32.gmra.mxu0 %v236
        %v614 = vpop.f32.mrf.mxu0
        %v615 = vadd.f32 %v440, %v614
        %616 = vdwg.mxu0
        %617 = vmatpush.msra.mxu0 %v425
        %618 = vmatpush.msra.mxu0 %v413
        %619 = vmatpush.msra.mxu0 %v401
        %620 = vmatpush.msra.mxu0 %v389
        %621 = vmatpush.msra.mxu0 %v377
        %622 = vmatpush.msra.mxu0 %v365
        %623 = vmatpush.msra.mxu0 %v353
        %624 = vmatpush.msra.mxu0 %v341
        %625 = vmatpush.msra.mxu0 %v329
        %626 = vmatpush.msra.mxu0 %v317
        %627 = vmatpush.msra.mxu0 %v305
        %628 = vmatpush.msra.mxu0 %v293
        %629 = vmatpush.msra.mxu0 %v281
        %630 = vmatpush.msra.mxu0 %v269
        %631 = vmatpush.msra.mxu0 %v257
        %632 = vmatpush.msra.mxu0 %v245
        %633 = vmatmul.f32.gmra.mxu0 %v236
        %v634 = vpop.f32.mrf.mxu0
        %v635 = vadd.f32 %v441, %v634
        %636 = vdwg.mxu0
        %637 = vmatpush.msra.mxu0 %v426
        %638 = vmatpush.msra.mxu0 %v414
        %639 = vmatpush.msra.mxu0 %v402
        %640 = vmatpush.msra.mxu0 %v390
        %641 = vmatpush.msra.mxu0 %v378
        %642 = vmatpush.msra.mxu0 %v366
        %643 = vmatpush.msra.mxu0 %v354
        %644 = vmatpush.msra.mxu0 %v342
        %645 = vmatpush.msra.mxu0 %v330
        %646 = vmatpush.msra.mxu0 %v318
        %647 = vmatpush.msra.mxu0 %v306
        %648 = vmatpush.msra.mxu0 %v294
        %649 = vmatpush.msra.mxu0 %v282
        %650 = vmatpush.msra.mxu0 %v270
        %651 = vmatpush.msra.mxu0 %v258
        %652 = vmatpush.msra.mxu0 %v246
        %653 = vmatmul.f32.gmra.mxu0 %v236
        %v654 = vpop.f32.mrf.mxu0
        %v655 = vadd.f32 %v442, %v654
        %656 = vdwg.mxu0
        %657 = vmatpush.msra.mxu0 %v427
        %658 = vmatpush.msra.mxu0 %v415
        %659 = vmatpush.msra.mxu0 %v403
        %660 = vmatpush.msra.mxu0 %v391
        %661 = vmatpush.msra.mxu0 %v379
        %662 = vmatpush.msra.mxu0 %v367
        %663 = vmatpush.msra.mxu0 %v355
        %664 = vmatpush.msra.mxu0 %v343
        %665 = vmatpush.msra.mxu0 %v331
        %666 = vmatpush.msra.mxu0 %v319
        %667 = vmatpush.msra.mxu0 %v307
        %668 = vmatpush.msra.mxu0 %v295
        %669 = vmatpush.msra.mxu0 %v283
        %670 = vmatpush.msra.mxu0 %v271
        %671 = vmatpush.msra.mxu0 %v259
        %672 = vmatpush.msra.mxu0 %v247
        %673 = vmatmul.f32.gmra.mxu0 %v236
        %v674 = vpop.f32.mrf.mxu0
        %v675 = vadd.f32 %v443, %v674
        %676 = vdwg.mxu0
        %677 = vmatpush.msra.mxu0 %v428
        %678 = vmatpush.msra.mxu0 %v416
        %679 = vmatpush.msra.mxu0 %v404
        %680 = vmatpush.msra.mxu0 %v392
        %681 = vmatpush.msra.mxu0 %v380
        %682 = vmatpush.msra.mxu0 %v368
        %683 = vmatpush.msra.mxu0 %v356
        %684 = vmatpush.msra.mxu0 %v344
        %685 = vmatpush.msra.mxu0 %v332
        %686 = vmatpush.msra.mxu0 %v320
        %687 = vmatpush.msra.mxu0 %v308
        %688 = vmatpush.msra.mxu0 %v296
        %689 = vmatpush.msra.mxu0 %v284
        %690 = vmatpush.msra.mxu0 %v272
        %691 = vmatpush.msra.mxu0 %v260
        %692 = vmatpush.msra.mxu0 %v248
        %693 = vmatmul.f32.gmra.mxu0 %v236
        %v694 = vpop.f32.mrf.mxu0
        %v695 = vadd.f32 %v444, %v694
        %696 = vdwg.mxu0
        %697 = vst [vmem:[%s235] sm:$0xff] %v475
        %698 = vst [vmem:[%s235 + $0x8] sm:$0xff] %v495
        %699 = vst [vmem:[%s235 + $0x10] sm:$0xff] %v515
        %700 = vst [vmem:[%s235 + $0x18] sm:$0xff] %v535
        %701 = vst [vmem:[%s235 + $0x20] sm:$0xff] %v555
        %702 = vst [vmem:[%s235 + $0x28] sm:$0xff] %v575
        %703 = vst [vmem:[%s235 + $0x30] sm:$0xff] %v595
        %704 = vst [vmem:[%s235 + $0x38] sm:$0xff] %v615
        %705 = vst [vmem:[%s235 + $0x40] sm:$0xff] %v635
        %706 = vst [vmem:[%s235 + $0x48] sm:$0xff] %v655
        %707 = vst [vmem:[%s235 + $0x50] sm:$0xff] %v675
        %708 = vst [vmem:[%s235 + $0x58] sm:$0xff] %v695
        %s709 = sand.u32 %s113, 1
        %s710 = scalar_lea.sflag [#allocation4], %s709
        %s711 = sand.u32 %s113, 1
        %s712 = smul.addr %s711, 96
        %s713 = scalar_lea.vmem [#allocation8], %s712
        // Predicated region
        $region45: #{tpu_custom_call.1} parent=31 // pred_check
          %p714 = pneg %p123
        $region46: #{tpu_custom_call.1} parent=31 // pred_check_branch
          %716 = sbr.rel (%p714) target = $region48
        $region47: #{tpu_custom_call.1} parent=31 // pred_region
          %718 = vsyncadd %s710, 0
          %s719 = smul.addr %s26, 12
          %s720 = smul.addr %s25, 12
          %s721 = sadd.s32 %s719, %s720
          %s722 = smul.addr %s721, 8
          %s723 = scalar_lea.hbm %s3, %s722
          %s725 = sshll.u32 %s713, 4
          %s726 = int_to_ptr.vmem [resolvable:$true] %s725
          %s727 = sshll.u32 %s723, 4
          %s728 = int_to_ptr.hbm [resolvable:$true] %s727
          %730 = dma.vmem_to_hbm [thread:$0]  %s726, 1536, %s728, %s710
        $region48: #{tpu_custom_call.1} parent=31 // pred_fallthru
          _
      $region32: #{tpu_custom_call.1} parent=5 // pred_fallthru
        _
      %p731 = scmp.le.s32.totalorder 2, %s16
      // Predicated region
      $region49: #{tpu_custom_call.1} parent=5 // pred_check
        %p732 = pneg %p731
      $region50: #{tpu_custom_call.1} parent=5 // pred_check_branch
        %734 = sbr.rel (%p732) target = $region52
      $region51: #{tpu_custom_call.1} parent=5 // pred_region
        %s735 = ssub.s32 %s16, 2
        // Predicated region
        $region53: #{tpu_custom_call.1} parent=51 // pred_check
          %p736 = pneg %p129
        $region54: #{tpu_custom_call.1} parent=51 // pred_check_branch
          %738 = sbr.rel (%p736) target = $region56
        $region55: #{tpu_custom_call.1} parent=51 // pred_region
          %s739 = sand.u32 %s114, 1
          %s740 = scalar_lea.sflag [#allocation4], %s739
          %s741 = sand.u32 %s114, 1
          %s742 = smul.addr %s741, 96
          %s743 = scalar_lea.vmem [#allocation8], %s742
          %745 = dma.done %s740, 1536
        $region56: #{tpu_custom_call.1} parent=51 // pred_fallthru
          _
      $region52: #{tpu_custom_call.1} parent=5 // pred_fallthru
        _
    $region6: #{tpu_custom_call.1} parent=1 // loop_footer
      %s20 = sadd.s32 1, %s16
    $region7: #{tpu_custom_call.1} parent=1 // loop_footer_branch
      %15 = sbr.rel target = $region3
    $region8: #{tpu_custom_call.1} parent=1 // loop_exit
      _
    %746 = vsyncpa [#allocation3], 1
    %s747 = scalar_lea.sflag [#allocation3], 1
    %748 = vsyncpa %s747, 1
    %749 = vsyncpa [#allocation6], 1
    %750 = vsyncpa [#allocation4], 1
    %s751 = scalar_lea.sflag [#allocation4], 1
    %752 = vsyncpa %s751, 1

</llo_original>
